<compile_context>
chip_gen: v7x
topology: tpu7x:2x2x1
jax: 0.10.0
libtpu: 0.0.40
codegen_flags: <defaults>
</compile_context>

<pallas_src>
import functools

import jax
import jax.numpy as jnp
from jax.experimental import pallas as pl
from jax.experimental.pallas import tpu as pltpu


def _round_up(x, m):
    return ((x + m - 1) // m) * m


def _cdiv(a, b):
    return -(-a // b)


# ---------------------------------------------------------------------------
# Kernel: one row tile of the fused forward.
#   out[tile, W_pad] = xs[tile, C_slow] @ Ws + xf[tile, C_fast] @ Wf + b
# Column layout of the (lane-padded) output slab:
#   [ slow_feat (H/2) | fast_feat (H/2) | fc logits (NC)
#     | fc_intra[0] logits (NC) | fc_intra[1] logits (NC) | zero pad ]
# ---------------------------------------------------------------------------
def slowfast_fuse_kernel(xs_ref, xf_ref, ws_ref, wf_ref, b_ref, out_ref):
    out_ref[...] = (
        jnp.dot(xs_ref[...], ws_ref[...], preferred_element_type=jnp.float32)
        + jnp.dot(xf_ref[...], wf_ref[...], preferred_element_type=jnp.float32)
        + b_ref[...]
    )


def compose_params(params, *, compute_dtype=jnp.float32):
    """Fold the k=1 convs and the three linear heads into two composite weights + bias.

    Call ONCE at init (hoisted out of the per-forward path).  Composition products are
    computed in f32 at HIGHEST precision; only the final tensors are cast to
    `compute_dtype` (set bf16 to halve HBM read traffic, at an accuracy tradeoff).
    """
    ws, bs = params['ws'], params['bs']
    wf, bf = params['wf'], params['bf']
    wfc, bfc = params['wfc'], params['bfc']
    w0, b0 = params['w0'], params['b0']
    w1, b1 = params['w1'], params['b1']

    hh = ws.shape[1]                 # hidden // 2
    nc = wfc.shape[1]                # num_classes
    c_slow, c_fast = ws.shape[0], wf.shape[0]
    w_out = 2 * hh + 3 * nc
    w_pad = _round_up(w_out, 128)    # lane-dense output width
    pad = w_pad - w_out

    hp = jax.lax.Precision.HIGHEST
    dot = lambda a, b: jnp.dot(a, b, precision=hp)
    wfc_top, wfc_bot = wfc[:hh], wfc[hh:]

    w_slow = jnp.concatenate(
        [ws,
         jnp.zeros((c_slow, hh), jnp.float32),
         dot(ws, wfc_top),
         dot(ws, w0),
         jnp.zeros((c_slow, nc + pad), jnp.float32)], axis=1)
    w_fast = jnp.concatenate(
        [jnp.zeros((c_fast, hh), jnp.float32),
         wf,
         dot(wf, wfc_bot),
         jnp.zeros((c_fast, nc), jnp.float32),
         dot(wf, w1),
         jnp.zeros((c_fast, pad), jnp.float32)], axis=1)
    b_all = jnp.concatenate(
        [bs,
         bf,
         dot(bs, wfc_top) + dot(bf, wfc_bot) + bfc,
         dot(bs, w0) + b0,
         dot(bf, w1) + b1,
         jnp.zeros((1, pad), jnp.float32)], axis=1)

    return {
        'w_slow': w_slow.astype(compute_dtype),
        'w_fast': w_fast.astype(compute_dtype),
        'b_all': b_all.astype(jnp.float32),
        'hh': hh, 'nc': nc, 'w_out': w_out, 'w_pad': w_pad,
        'compute_dtype': compute_dtype,
    }


def _choose_tile(M, tile_m):
    """Row-tile selection: multiple of 8, >= 2 grid steps when there is enough work
    (v7x megacore), and balanced so the last block isn't mostly dead rows."""
    M8 = _round_up(max(M, 1), 8)
    tile = min(_round_up(tile_m, 8), M8)
    steps = _cdiv(M8, tile)
    if M8 >= 16:
        steps = max(steps, 2)
    return _round_up(_cdiv(M8, steps), 8)


def slow_fast_fuse(frame_feat, lgt, composed, *, tile_m=512):
    slow_path, fast_path = frame_feat              # (N, C_slow, T), (N, C_fast, T)
    N, C_slow, T = slow_path.shape
    _, C_fast, _ = fast_path.shape
    hh, nc = composed['hh'], composed['nc']
    H = 2 * hh
    w_pad = composed['w_pad']
    cdt = composed['compute_dtype']

    M = T * N
    tile = _choose_tile(M, tile_m)
    grid = _cdiv(M, tile)   # non-divisible M: Pallas masks the last partial block

    # Time-major flatten: (N, C, T) -> (T, N, C) -> (T*N, C).  No channel concat, no pad.
    slow_x = jnp.transpose(slow_path, (2, 0, 1)).reshape(M, C_slow).astype(cdt)
    fast_x = jnp.transpose(fast_path, (2, 0, 1)).reshape(M, C_fast).astype(cdt)

    # Only set an explicit VMEM limit when the default scoped limit on the smallest
    # chip (v5e: 16 MiB) would be exceeded (double-buffered I/O tiles + resident weights).
    itemsize = jnp.dtype(cdt).itemsize
    vmem_need = (2 * tile * (C_slow + C_fast) * itemsize        # input tiles (x2 buffers)
                 + 2 * tile * w_pad * 4                          # output tiles (x2 buffers)
                 + (C_slow + C_fast) * w_pad * itemsize          # resident weights
                 + w_pad * 4)                                    # bias
    compiler_kwargs = dict(dimension_semantics=("parallel",))
    if int(vmem_need * 1.5) > (16 << 20):
        compiler_kwargs['vmem_limit_bytes'] = min(100 << 20, int(vmem_need * 1.5))

    out = pl.pallas_call(
        slowfast_fuse_kernel,
        out_shape=jax.ShapeDtypeStruct((M, w_pad), jnp.float32),
        grid=(grid,),
        in_specs=[
            pl.BlockSpec((tile, C_slow), lambda i: (i, 0)),    # slow activation row tile
            pl.BlockSpec((tile, C_fast), lambda i: (i, 0)),    # fast activation row tile
            pl.BlockSpec((C_slow, w_pad), lambda i: (0, 0)),   # composite slow weight (resident)
            pl.BlockSpec((C_fast, w_pad), lambda i: (0, 0)),   # composite fast weight (resident)
            pl.BlockSpec((1, w_pad), lambda i: (0, 0)),        # composite bias (resident)
        ],
        out_specs=pl.BlockSpec((tile, w_pad), lambda i: (i, 0)),
        compiler_params=pltpu.CompilerParams(**compiler_kwargs),
    )(slow_x, fast_x, composed['w_slow'], composed['w_fast'], composed['b_all'])

    # Every result is a pure column slice + reshape of the time-major slab: no transposes.
    def view(lo, hi):
        return out[:, lo:hi].reshape(T, N, hi - lo)

    return {
        'inter_feat': view(0, H),
        'intra_feat': [view(0, hh), view(hh, H)],
        'conv_inter_logits': view(H, H + nc),
        'conv_intra_logits': [view(H + nc, H + 2 * nc), view(H + 2 * nc, H + 3 * nc)],
        'feat_len': lgt,   # equivalent of lgt.cpu()
    }


def _reference(frame_feat, params):
    """Pure-JAX reference mirroring the PyTorch forward (for correctness check)."""
    mm = functools.partial(jnp.matmul, precision=jax.lax.Precision.HIGHEST)
    slow_path, fast_path = frame_feat
    slow_x = jnp.transpose(slow_path, (0, 2, 1))   # (N, T, C_slow)
    fast_x = jnp.transpose(fast_path, (0, 2, 1))
    slow_feat = mm(slow_x, params['ws']) + params['bs'][0]
    fast_feat = mm(fast_x, params['wf']) + params['bf'][0]
    inter = jnp.concatenate([slow_feat, fast_feat], axis=-1)
    inter_log = mm(inter, params['wfc']) + params['bfc'][0]
    intra0 = mm(slow_feat, params['w0']) + params['b0'][0]
    intra1 = mm(fast_feat, params['w1']) + params['b1'][0]
    perm = lambda x: jnp.transpose(x, (1, 0, 2))   # (N, T, C) -> (T, N, C)
    return {
        'inter_feat': perm(inter),
        'intra_feat': [perm(slow_feat), perm(fast_feat)],
        'conv_inter_logits': perm(inter_log),
        'conv_intra_logits': [perm(intra0), perm(intra1)],
    }


if __name__ == "__main__":
    key = jax.random.PRNGKey(0)
    N, T = 2, 8
    fast_input_size, slow_input_size = 24, 16
    hidden_size, num_classes = 32, 10

    keys = jax.random.split(key, 12)

    def u(k, shape, fan_in):
        bound = 1.0 / jnp.sqrt(jnp.float32(fan_in))
        return jax.random.uniform(k, shape, jnp.float32, -bound, bound)

    # Weights stored (in, out); PyTorch Conv1d weight is (out, in, 1), Linear is (out, in).
    params = {
        'ws': u(keys[0], (slow_input_size, hidden_size // 2), slow_input_size),
        'bs': u(keys[1], (1, hidden_size // 2), slow_input_size),
        'wf': u(keys[2], (fast_input_size, hidden_size // 2), fast_input_size),
        'bf': u(keys[3], (1, hidden_size // 2), fast_input_size),
        'wfc': u(keys[4], (hidden_size, num_classes), hidden_size),
        'bfc': u(keys[5], (1, num_classes), hidden_size),
        'w0': u(keys[6], (hidden_size // 2, num_classes), hidden_size // 2),
        'b0': u(keys[7], (1, num_classes), hidden_size // 2),
        'w1': u(keys[8], (hidden_size // 2, num_classes), hidden_size // 2),
        'b1': u(keys[9], (1, num_classes), hidden_size // 2),
    }

    slow_path = jax.random.normal(keys[10], (N, slow_input_size, T), jnp.float32)
    fast_path = jax.random.normal(keys[11], (N, fast_input_size, T), jnp.float32)
    lgt = jnp.array([T, T], dtype=jnp.int32)

    # Compose the five weight matrices once (init-time), then run the fused kernel.
    composed = jax.tree_util.tree_map(
        lambda x: jax.block_until_ready(x) if isinstance(x, jax.Array) else x,
        compose_params(params, compute_dtype=jnp.float32))

    out = slow_fast_fuse((slow_path, fast_path), lgt, composed)
    out = jax.block_until_ready(out)

    ref = _reference((slow_path, fast_path), params)
    # Weight pre-composition slightly reorders fp32 accumulation vs. the reference.
    tol = dict(atol=1e-4, rtol=1e-4)
    assert jnp.allclose(out['inter_feat'], ref['inter_feat'], **tol)
    assert jnp.allclose(out['conv_inter_logits'], ref['conv_inter_logits'], **tol)
    for i in range(2):
        assert jnp.allclose(out['intra_feat'][i], ref['intra_feat'][i], **tol)
        assert jnp.allclose(out['conv_intra_logits'][i], ref['conv_intra_logits'][i], **tol)
    assert out['inter_feat'].shape == (T, N, hidden_size)
    assert out['intra_feat'][0].shape == (T, N, hidden_size // 2)
    assert out['conv_inter_logits'].shape == (T, N, num_classes)
    assert out['conv_intra_logits'][1].shape == (T, N, num_classes)

    print("KERNEL_OK")
</pallas_src>

<mosaic_0001>
module attributes {stable_mosaic.version = 11 : i64} {
  func.func @slowfast_fuse_kernel(%arg0: i32, %arg1: memref<8x16xf32, #tpu.memory_space<vmem>>, %arg2: memref<8x24xf32, #tpu.memory_space<vmem>>, %arg3: memref<16x128xf32, #tpu.memory_space<vmem>>, %arg4: memref<24x128xf32, #tpu.memory_space<vmem>>, %arg5: memref<1x128xf32, #tpu.memory_space<vmem>>, %arg6: memref<8x128xf32, #tpu.memory_space<vmem>>) attributes {dimension_semantics = [#tpu.dimension_semantics<parallel>], iteration_bounds = array<i64: 2>, scalar_prefetch = 0 : i64, scratch_operands = 0 : i64, tpu.core_type = #tpu.core_type<tc>, window_params = [{transform_indices = @transform_0, window_bounds = array<i64: 8, 16>}, {transform_indices = @transform_1, window_bounds = array<i64: 8, 24>}, {pipeline_mode = #tpu.pipeline_mode<synchronous>, transform_indices = @transform_2, window_bounds = array<i64: 16, 128>}, {pipeline_mode = #tpu.pipeline_mode<synchronous>, transform_indices = @transform_3, window_bounds = array<i64: 24, 128>}, {pipeline_mode = #tpu.pipeline_mode<synchronous>, transform_indices = @transform_4, window_bounds = array<i64: 1, 128>}, {transform_indices = @transform_5, window_bounds = array<i64: 8, 128>}]} {
    %c0 = arith.constant 0 : index
    %c0_0 = arith.constant 0 : index
    %0 = vector.load %arg1[%c0, %c0_0] : memref<8x16xf32, #tpu.memory_space<vmem>>, vector<8x16xf32>
    %c0_1 = arith.constant 0 : index
    %c0_2 = arith.constant 0 : index
    %1 = vector.load %arg3[%c0_1, %c0_2] : memref<16x128xf32, #tpu.memory_space<vmem>>, vector<16x128xf32>
    %cst = arith.constant dense<0.000000e+00> : vector<8x128xf32>
    %2 = tpu.matmul %0, %1, %cst {dimension_numbers = #tpu.dot_dimension_numbers<[1], [0], [0], [1], [0, 0, 1, 1], [], []>} : vector<8x16xf32>, vector<16x128xf32>, vector<8x128xf32> -> vector<8x128xf32>
    %c0_3 = arith.constant 0 : index
    %c0_4 = arith.constant 0 : index
    %3 = vector.load %arg2[%c0_3, %c0_4] : memref<8x24xf32, #tpu.memory_space<vmem>>, vector<8x24xf32>
    %c0_5 = arith.constant 0 : index
    %c0_6 = arith.constant 0 : index
    %4 = vector.load %arg4[%c0_5, %c0_6] : memref<24x128xf32, #tpu.memory_space<vmem>>, vector<24x128xf32>
    %cst_7 = arith.constant dense<0.000000e+00> : vector<8x128xf32>
    %5 = tpu.matmul %3, %4, %cst_7 {dimension_numbers = #tpu.dot_dimension_numbers<[1], [0], [0], [1], [0, 0, 1, 1], [], []>} : vector<8x24xf32>, vector<24x128xf32>, vector<8x128xf32> -> vector<8x128xf32>
    %6 = arith.addf %2, %5 : vector<8x128xf32>
    %c0_8 = arith.constant 0 : index
    %c0_9 = arith.constant 0 : index
    %7 = vector.load %arg5[%c0_8, %c0_9] : memref<1x128xf32, #tpu.memory_space<vmem>>, vector<1x128xf32>
    %8 = vector.broadcast %7 : vector<1x128xf32> to vector<8x128xf32>
    %9 = arith.addf %6, %8 : vector<8x128xf32>
    %c0_10 = arith.constant 0 : index
    %c0_11 = arith.constant 0 : index
    %10 = vector.load %arg6[%c0_10, %c0_11] : memref<8x128xf32, #tpu.memory_space<vmem>>, vector<8x128xf32>
    tpu.vector_store %arg6[%c0_10, %c0_11], %9 {strides = array<i32>} : memref<8x128xf32, #tpu.memory_space<vmem>>, vector<8x128xf32>,
    return
  }
  func.func @transform_0(%arg0: i32) -> (i32, i32) {
    %c0_i32 = arith.constant 0 : i32
    %c0_i32_0 = arith.constant 0 : i32
    return %arg0, %c0_i32 : i32, i32
  }
  func.func @transform_1(%arg0: i32) -> (i32, i32) {
    %c0_i32 = arith.constant 0 : i32
    %c0_i32_0 = arith.constant 0 : i32
    return %arg0, %c0_i32 : i32, i32
  }
  func.func @transform_2(%arg0: i32) -> (i32, i32) {
    %c0_i32 = arith.constant 0 : i32
    %c0_i32_0 = arith.constant 0 : i32
    %c0_i32_1 = arith.constant 0 : i32
    return %c0_i32, %c0_i32_0 : i32, i32
  }
  func.func @transform_3(%arg0: i32) -> (i32, i32) {
    %c0_i32 = arith.constant 0 : i32
    %c0_i32_0 = arith.constant 0 : i32
    %c0_i32_1 = arith.constant 0 : i32
    return %c0_i32, %c0_i32_0 : i32, i32
  }
  func.func @transform_4(%arg0: i32) -> (i32, i32) {
    %c0_i32 = arith.constant 0 : i32
    %c0_i32_0 = arith.constant 0 : i32
    %c0_i32_1 = arith.constant 0 : i32
    return %c0_i32, %c0_i32_0 : i32, i32
  }
  func.func @transform_5(%arg0: i32) -> (i32, i32) {
    %c0_i32 = arith.constant 0 : i32
    %c0_i32_0 = arith.constant 0 : i32
    return %arg0, %c0_i32 : i32, i32
  }
}

</mosaic_0001>

<llo_original>
// kernel: tpu_custom_call.1
$region0: #{tpu_custom_call.1}
  #allocation0 [shape = 'u32[]', space=smem, size = 0x4, offset = 0x4, fixed_abs, tag = 'smem constant byte address 0x4 - core index']
  #allocation1 [shape = 'u32[144,128]{1,0:T(1,128)}', space=vmem, size = 0x12000, scoped, tag = 'internal scratch']
  %s0 = inlined_call_operand.hbm [shape: f32[16,16], index: 0, kind: input, shape index: {}]
  %s1 = inlined_call_operand.hbm [shape: f32[16,24], index: 1, kind: input, shape index: {}]
  %s2 = inlined_call_operand.hbm [shape: f32[16,128], index: 2, kind: input, shape index: {}]
  %s3 = inlined_call_operand.hbm [shape: f32[24,128], index: 3, kind: input, shape index: {}]
  %s4 = inlined_call_operand.vmem [shape: f32[1,128], index: 4, kind: input, shape index: {}]
  %s5 = inlined_call_operand.hbm [shape: f32[16,128], index: 5, kind: output, shape index: {}]
  %s6 = sld [smem:[#allocation0]]
  $region69: #{tpu_custom_call.1} parent=0
    _
  %s8 = ssub.s32 1, %s6
  %s9 = scalar_select 0, %s8, %s6
  $region1: #{tpu_custom_call.1} parent=0
    #allocation2 [shape = 'u8[8192]{0}', space=vmem, size = 0x2000, scoped, tag = 'input window, operand 0']
    #allocation3 [shape = 's32[2]{0}', space=sflag, size = 0x8, scoped, tag = 'scoped memory for tpu_custom_call.1']
    #allocation4 [shape = 's32[2]{0}', space=sflag, size = 0x8, scoped, tag = 'scoped memory for tpu_custom_call.1']
    #allocation5 [shape = 'u8[8192]{0}', space=vmem, size = 0x2000, scoped, tag = 'input window, operand 1']
    #allocation6 [shape = 's32[2]{0}', space=sflag, size = 0x8, scoped, tag = 'scoped memory for tpu_custom_call.1']
    #allocation7 [shape = 'u8[8192]{0}', space=vmem, size = 0x2000, scoped, tag = 'input window, operand 2, single buffered']
    #allocation8 [shape = 'u8[12288]{0}', space=vmem, size = 0x3000, scoped, tag = 'input window, operand 3, single buffered']
    #allocation9 [shape = 's32[1]{0}', space=sflag, size = 0x4, scoped, tag = 'scoped memory for tpu_custom_call.1']
    #allocation10 [shape = 'u8[8192]{0}', space=vmem, size = 0x2000, scoped, tag = 'output window, operand 0']
    %10 = vsyncpa [#allocation3], 0
    %s11 = scalar_lea.sflag [#allocation3], 1
    %12 = vsyncpa %s11, 0
    %13 = vsyncpa [#allocation6], 0
    %s14 = scalar_lea.sflag [#allocation6], 1
    %15 = vsyncpa %s14, 0
    %16 = vsyncpa [#allocation9], 0
    %17 = vsyncpa [#allocation4], 0
    %s18 = scalar_lea.sflag [#allocation4], 1
    %19 = vsyncpa %s18, 0
    loop: start=0, step=1, limit=4
    $region2: #{tpu_custom_call.1} parent=1 // loop_pre_header
      _
    $region3: #{tpu_custom_call.1} parent=1 // loop_header
      %s21 = sphi 0, %s25
      %p22 = scmp.ge.s32.totalorder %s21, 4
      %s31 = sphi 0, %s33
      %s34 = sphi 0, %s31
      %s35 = sphi 0, %s34
      %s51 = sphi 0, %s35
      %s57 = sphi 0, %s59
      %s60 = sphi 0, %s57
      %s61 = sphi 0, %s60
      %s77 = sphi 0, %s61
      %s81 = sphi 0, %s81
      %s83 = sphi 0, %s81
      %s84 = sphi 0, %s83
      %s98 = sphi 0, %s84
      %s102 = sphi 0, %s102
      %s104 = sphi 0, %s102
      %s105 = sphi 0, %s104
      %s119 = sphi 0, %s105
      %s123 = sphi 0, %s123
      %s125 = sphi 0, %s123
      %s126 = sphi 0, %s125
      %s140 = sphi 0, %s126
      %s146 = sphi 0, %s148
      %s149 = sphi 0, %s146
      %s150 = sphi 0, %s149
      %s166 = sphi 0, %s150
    $region4: #{tpu_custom_call.1} parent=1 // loop_header_branch
      %24 = sbr.rel (%p22) target = $region8
    $region5: #{tpu_custom_call.1} parent=1 // loop_body
      %s26 = ssub.s32 %s21, 1
      %s27 = ssub.s32 %s21, 2
      %s28 = sadd.s32 %s21, 1
      %s29 = ssub.s32 %s21, %s28
      %p30 = scmp.eq.s32.totalorder %s29, 0
      %s32 = sadd.s32 %s31, 1
      %s33 = scalar_select %p30, %s31, %s32
      %p36 = pneg %p30
      %p37 = scmp.eq.s32.totalorder %s21, 1
      %p38 = por %p36, %p37
      %p39 = scmp.ne.s32.totalorder %s31, %s34
      %p40 = scmp.eq.s32.totalorder %s21, 0
      %p41 = por %p39, %p40
      %p42 = scmp.ne.s32.totalorder %s31, %s34
      %p43 = scmp.eq.s32.totalorder %s26, 1
      %p44 = por %p42, %p43
      %p45 = scmp.ne.s32.totalorder %s34, %s35
      %p46 = scmp.eq.s32.totalorder %s26, 0
      %p47 = por %p45, %p46
      %p48 = scmp.ne.s32.totalorder %s34, %s35
      %p49 = scmp.eq.s32.totalorder %s27, 1
      %p50 = por %p48, %p49
      %p52 = scmp.ne.s32.totalorder %s35, %s51
      %p53 = scmp.eq.s32.totalorder %s27, 0
      %p54 = por %p52, %p53
      %s55 = ssub.s32 %s21, %s28
      %p56 = scmp.eq.s32.totalorder %s55, 0
      %s58 = sadd.s32 %s57, 1
      %s59 = scalar_select %p56, %s57, %s58
      %p62 = pneg %p56
      %p63 = scmp.eq.s32.totalorder %s21, 1
      %p64 = por %p62, %p63
      %p65 = scmp.ne.s32.totalorder %s57, %s60
      %p66 = scmp.eq.s32.totalorder %s21, 0
      %p67 = por %p65, %p66
      %p68 = scmp.ne.s32.totalorder %s57, %s60
      %p69 = scmp.eq.s32.totalorder %s26, 1
      %p70 = por %p68, %p69
      %p71 = scmp.ne.s32.totalorder %s60, %s61
      %p72 = scmp.eq.s32.totalorder %s26, 0
      %p73 = por %p71, %p72
      %p74 = scmp.ne.s32.totalorder %s60, %s61
      %p75 = scmp.eq.s32.totalorder %s27, 1
      %p76 = por %p74, %p75
      %p78 = scmp.ne.s32.totalorder %s61, %s77
      %p79 = scmp.eq.s32.totalorder %s27, 0
      %p80 = por %p78, %p79
      %s82 = sadd.s32 %s81, 1
      %p85 = scmp.eq.s32.totalorder %s21, 1
      %p86 = scmp.ne.s32.totalorder %s81, %s83
      %p87 = scmp.eq.s32.totalorder %s21, 0
      %p88 = por %p86, %p87
      %p89 = scmp.ne.s32.totalorder %s81, %s83
      %p90 = scmp.eq.s32.totalorder %s26, 1
      %p91 = por %p89, %p90
      %p92 = scmp.ne.s32.totalorder %s83, %s84
      %p93 = scmp.eq.s32.totalorder %s26, 0
      %p94 = por %p92, %p93
      %p95 = scmp.ne.s32.totalorder %s83, %s84
      %p96 = scmp.eq.s32.totalorder %s27, 1
      %p97 = por %p95, %p96
      %p99 = scmp.ne.s32.totalorder %s84, %s98
      %p100 = scmp.eq.s32.totalorder %s27, 0
      %p101 = por %p99, %p100
      %s103 = sadd.s32 %s102, 1
      %p106 = scmp.eq.s32.totalorder %s21, 1
      %p107 = scmp.ne.s32.totalorder %s102, %s104
      %p108 = scmp.eq.s32.totalorder %s21, 0
      %p109 = por %p107, %p108
      %p110 = scmp.ne.s32.totalorder %s102, %s104
      %p111 = scmp.eq.s32.totalorder %s26, 1
      %p112 = por %p110, %p111
      %p113 = scmp.ne.s32.totalorder %s104, %s105
      %p114 = scmp.eq.s32.totalorder %s26, 0
      %p115 = por %p113, %p114
      %p116 = scmp.ne.s32.totalorder %s104, %s105
      %p117 = scmp.eq.s32.totalorder %s27, 1
      %p118 = por %p116, %p117
      %p120 = scmp.ne.s32.totalorder %s105, %s119
      %p121 = scmp.eq.s32.totalorder %s27, 0
      %p122 = por %p120, %p121
      %s124 = sadd.s32 %s123, 1
      %p127 = scmp.eq.s32.totalorder %s21, 1
      %p128 = scmp.ne.s32.totalorder %s123, %s125
      %p129 = scmp.eq.s32.totalorder %s21, 0
      %p130 = por %p128, %p129
      %p131 = scmp.ne.s32.totalorder %s123, %s125
      %p132 = scmp.eq.s32.totalorder %s26, 1
      %p133 = por %p131, %p132
      %p134 = scmp.ne.s32.totalorder %s125, %s126
      %p135 = scmp.eq.s32.totalorder %s26, 0
      %p136 = por %p134, %p135
      %p137 = scmp.ne.s32.totalorder %s125, %s126
      %p138 = scmp.eq.s32.totalorder %s27, 1
      %p139 = por %p137, %p138
      %p141 = scmp.ne.s32.totalorder %s126, %s140
      %p142 = scmp.eq.s32.totalorder %s27, 0
      %p143 = por %p141, %p142
      %s144 = ssub.s32 %s21, %s28
      %p145 = scmp.eq.s32.totalorder %s144, 0
      %s147 = sadd.s32 %s146, 1
      %s148 = scalar_select %p145, %s146, %s147
      %p151 = pneg %p145
      %p152 = scmp.eq.s32.totalorder %s21, 1
      %p153 = por %p151, %p152
      %p154 = scmp.ne.s32.totalorder %s146, %s149
      %p155 = scmp.eq.s32.totalorder %s21, 0
      %p156 = por %p154, %p155
      %p157 = scmp.ne.s32.totalorder %s146, %s149
      %p158 = scmp.eq.s32.totalorder %s26, 1
      %p159 = por %p157, %p158
      %p160 = scmp.ne.s32.totalorder %s149, %s150
      %p161 = scmp.eq.s32.totalorder %s26, 0
      %p162 = por %p160, %p161
      %p163 = scmp.ne.s32.totalorder %s149, %s150
      %p164 = scmp.eq.s32.totalorder %s27, 1
      %p165 = por %p163, %p164
      %p167 = scmp.ne.s32.totalorder %s150, %s166
      %p168 = scmp.eq.s32.totalorder %s27, 0
      %p169 = por %p167, %p168
      %p170 = scmp.le.s32.totalorder 1, %s21
      %p171 = scmp.lt.s32.totalorder %s21, 3
      %p172 = pnand %p170, %p171
      %p173 = pneg %p172
      // Predicated region
      $region9: #{tpu_custom_call.1} parent=5 // pred_check
        _
      $region10: #{tpu_custom_call.1} parent=5 // pred_check_branch
        %175 = sbr.rel (%p172) target = $region12
      $region11: #{tpu_custom_call.1} parent=5 // pred_region
        %s176 = ssub.s32 %s21, 1
        // Predicated region
        $region13: #{tpu_custom_call.1} parent=11 // pred_check
          %p177 = pneg %p94
        $region14: #{tpu_custom_call.1} parent=11 // pred_check_branch
          %179 = sbr.rel (%p177) target = $region16
        $region15: #{tpu_custom_call.1} parent=11 // pred_region
          %s181 = ssub.s32 256, 256
          %182 = vsyncadd [#allocation6], %s181
          %s183 = sshll.u32 [#allocation7], 4
          %s184 = int_to_ptr.vmem [resolvable:$true] %s183
          %189 = dma.hbm_to_vmem [thread:$0]  %s2, 256, %s184, [#allocation6], 128, 128, 8
        $region16: #{tpu_custom_call.1} parent=11 // pred_fallthru
          _
        // Predicated region
        $region17: #{tpu_custom_call.1} parent=11 // pred_check
          %p190 = pneg %p115
        $region18: #{tpu_custom_call.1} parent=11 // pred_check_branch
          %192 = sbr.rel (%p190) target = $region20
        $region19: #{tpu_custom_call.1} parent=11 // pred_region
          %s194 = ssub.s32 384, 384
          %195 = vsyncadd [#allocation9], %s194
          %s196 = sshll.u32 [#allocation8], 4
          %s197 = int_to_ptr.vmem [resolvable:$true] %s196
          %202 = dma.hbm_to_vmem [thread:$0]  %s3, 384, %s197, [#allocation9], 128, 128, 8
        $region20: #{tpu_custom_call.1} parent=11 // pred_fallthru
          _
        // Predicated region
        $region21: #{tpu_custom_call.1} parent=11 // pred_check
          %p203 = pneg %p136
        $region22: #{tpu_custom_call.1} parent=11 // pred_check_branch
          %205 = sbr.rel (%p203) target = $region24
        $region23: #{tpu_custom_call.1} parent=11 // pred_region
          _
        $region24: #{tpu_custom_call.1} parent=11 // pred_fallthru
          _
      $region12: #{tpu_custom_call.1} parent=5 // pred_fallthru
        _
      %p206 = scmp.lt.s32.totalorder %s21, 2
      // Predicated region
      $region25: #{tpu_custom_call.1} parent=5 // pred_check
        %p207 = pneg %p206
      $region26: #{tpu_custom_call.1} parent=5 // pred_check_branch
        %209 = sbr.rel (%p207) target = $region28
      $region27: #{tpu_custom_call.1} parent=5 // pred_region
        // Predicated region
        $region29: #{tpu_custom_call.1} parent=27 // pred_check
          %p210 = pneg %p41
        $region30: #{tpu_custom_call.1} parent=27 // pred_check_branch
          %212 = sbr.rel (%p210) target = $region32
        $region31: #{tpu_custom_call.1} parent=27 // pred_region
          %s213 = sand.u32 %s31, 1
          %s214 = scalar_lea.sflag [#allocation3], %s213
          %s215 = sand.u32 %s31, 1
          %s216 = smul.addr %s215, 8
          %s217 = scalar_lea.vmem [#allocation2], %s216
          %s219 = ssub.s32 128, 128
          %220 = vsyncadd %s214, %s219
          %s221 = smul.addr %s21, 128
          %s222 = scalar_lea.hbm %s0, %s221
          %s224 = sshll.u32 %s217, 4
          %s225 = int_to_ptr.vmem [resolvable:$true] %s224
          %227 = dma.hbm_to_vmem [thread:$0]  %s222, 128, %s225, %s214
        $region32: #{tpu_custom_call.1} parent=27 // pred_fallthru
          _
        // Predicated region
        $region33: #{tpu_custom_call.1} parent=27 // pred_check
          %p228 = pneg %p67
        $region34: #{tpu_custom_call.1} parent=27 // pred_check_branch
          %230 = sbr.rel (%p228) target = $region36
        $region35: #{tpu_custom_call.1} parent=27 // pred_region
          %s231 = sand.u32 %s21, 1
          %s232 = scalar_lea.sflag [#allocation6], %s231
          %s233 = sand.u32 %s57, 1
          %s234 = smul.addr %s233, 8
          %s235 = scalar_lea.vmem [#allocation5], %s234
          %s237 = ssub.s32 128, 128
          %238 = vsyncadd %s232, %s237
          %s239 = smul.addr %s21, 128
          %s240 = scalar_lea.hbm %s1, %s239
          %s242 = sshll.u32 %s235, 4
          %s243 = int_to_ptr.vmem [resolvable:$true] %s242
          %245 = dma.hbm_to_vmem [thread:$0]  %s240, 128, %s243, %s232
        $region36: #{tpu_custom_call.1} parent=27 // pred_fallthru
          _
      $region28: #{tpu_custom_call.1} parent=5 // pred_fallthru
        _
      %p246 = scmp.le.s32.totalorder 1, %s21
      %p247 = scmp.lt.s32.totalorder %s21, 3
      %p248 = pnand %p246, %p247
      %p249 = pneg %p248
      // Predicated region
      $region37: #{tpu_custom_call.1} parent=5 // pred_check
        _
      $region38: #{tpu_custom_call.1} parent=5 // pred_check_branch
        %251 = sbr.rel (%p248) target = $region40
      $region39: #{tpu_custom_call.1} parent=5 // pred_region
        %s252 = ssub.s32 %s21, 1
        %s253 = sand.u32 %s34, 1
        %s254 = scalar_lea.sflag [#allocation3], %s253
        %s255 = sand.u32 %s34, 1
        %s256 = smul.addr %s255, 8
        %s257 = scalar_lea.vmem [#allocation2], %s256
        // Predicated region
        $region41: #{tpu_custom_call.1} parent=39 // pred_check
          %p258 = pneg %p47
        $region42: #{tpu_custom_call.1} parent=39 // pred_check_branch
          %260 = sbr.rel (%p258) target = $region44
        $region43: #{tpu_custom_call.1} parent=39 // pred_region
          %261 = dma.done %s254, 128
        $region44: #{tpu_custom_call.1} parent=39 // pred_fallthru
          _
        %s262 = sand.u32 %s26, 1
        %s263 = scalar_lea.sflag [#allocation6], %s262
        %s264 = sand.u32 %s60, 1
        %s265 = smul.addr %s264, 8
        %s266 = scalar_lea.vmem [#allocation5], %s265
        // Predicated region
        $region45: #{tpu_custom_call.1} parent=39 // pred_check
          %p267 = pneg %p73
        $region46: #{tpu_custom_call.1} parent=39 // pred_check_branch
          %269 = sbr.rel (%p267) target = $region48
        $region47: #{tpu_custom_call.1} parent=39 // pred_region
          %270 = dma.done %s263, 128
        $region48: #{tpu_custom_call.1} parent=39 // pred_fallthru
          _
        // Predicated region
        $region49: #{tpu_custom_call.1} parent=39 // pred_check
          %p271 = pneg %p94
        $region50: #{tpu_custom_call.1} parent=39 // pred_check_branch
          %273 = sbr.rel (%p271) target = $region52
        $region51: #{tpu_custom_call.1} parent=39 // pred_region
          %274 = dma.done [#allocation6], 256
        $region52: #{tpu_custom_call.1} parent=39 // pred_fallthru
          _
        // Predicated region
        $region53: #{tpu_custom_call.1} parent=39 // pred_check
          %p275 = pneg %p115
        $region54: #{tpu_custom_call.1} parent=39 // pred_check_branch
          %277 = sbr.rel (%p275) target = $region56
        $region55: #{tpu_custom_call.1} parent=39 // pred_region
          %278 = dma.done [#allocation9], 384
        $region56: #{tpu_custom_call.1} parent=39 // pred_fallthru
          _
        %s279 = sand.u32 %s34, 1
        %s280 = scalar_lea.sflag [#allocation3], %s279
        %s281 = sand.u32 %s34, 1
        %s282 = smul.addr %s281, 8
        %s283 = scalar_lea.vmem [#allocation2], %s282
        %p284 = pneg %p47
        %p285 = pneg %p44
        %s286 = sand.u32 %s26, 1
        %s287 = scalar_lea.sflag [#allocation6], %s286
        %s288 = sand.u32 %s60, 1
        %s289 = smul.addr %s288, 8
        %s290 = scalar_lea.vmem [#allocation5], %s289
        %p291 = pneg %p73
        %p292 = pneg %p70
        %p293 = pneg %p94
        %p294 = pneg %p91
        %p295 = pneg %p115
        %p296 = pneg %p112
        %p297 = pneg %p136
        %p298 = pneg %p133
        %p299 = pneg %p162
        %p300 = pneg %p159
        %s301 = sand.u32 %s149, 1
        %s302 = scalar_lea.sflag [#allocation4], %s301
        %s303 = sand.u32 %s149, 1
        %s304 = smul.addr %s303, 8
        %s305 = scalar_lea.vmem [#allocation10], %s304
        %v306 = vld [vmem:[%s257] sm:$0xff]
        %v307 = vld [vmem:[#allocation7] sm:$0xff]
        %v308 = vld [vmem:[#allocation7 + $0x8] sm:$0xff]
        %v309 = vld [vmem:[%s266] sm:$0xff]
        %v310 = vld [vmem:[#allocation8] sm:$0xff]
        %v311 = vld [vmem:[#allocation8 + $0x8] sm:$0xff]
        %v312 = vld [vmem:[#allocation8 + $0x10] sm:$0xff]
        %vm313 = vcmask 195584
        %v315 = vsel %vm313, %v309, 0
        %317 = vmatprep.subr.mxu0 0.0
        %318 = vmatpush1.msra.mxu0 %v310
        %319 = vmatprep.subr.mxu0 0.0
        %320 = vmatpush1.msra.mxu0 %v311
        %321 = vmatprep.subr.mxu0 0.0
        %322 = vmatpush1.msra.mxu0 %v312
        %323 = vmatprep.subr.mxu0 0.0
        %324 = vmatpush1.msra.mxu0 0.0
        %325 = vmatprep.subr.mxu0 0.0
        %326 = vmatpush1.msra.mxu0 0.0
        %327 = vmatprep.subr.mxu0 0.0
        %328 = vmatpush1.msra.mxu0 0.0
        %329 = vmatprep.subr.mxu0 0.0
        %330 = vmatpush1.msra.mxu0 0.0
        %331 = vmatprep.subr.mxu0 0.0
        %332 = vmatpush1.msra.mxu0 0.0
        %333 = vmatprep.subr.mxu0 0.0
        %334 = vmatpush1.msra.mxu0 0.0
        %335 = vmatprep.subr.mxu0 0.0
        %336 = vmatpush1.msra.mxu0 0.0
        %337 = vmatprep.subr.mxu0 0.0
        %338 = vmatpush1.msra.mxu0 0.0
        %339 = vmatprep.subr.mxu0 0.0
        %340 = vmatpush1.msra.mxu0 0.0
        %341 = vmatprep.subr.mxu0 0.0
        %342 = vmatpush1.msra.mxu0 0.0
        %343 = vmatprep.subr.mxu0 0.0
        %344 = vmatpush1.msra.mxu0 0.0
        %345 = vmatprep.subr.mxu0 0.0
        %346 = vmatpush1.msra.mxu0 0.0
        %347 = vmatprep.subr.mxu0 0.0
        %348 = vmatpush1.msra.mxu0 0.0
        %349 = vmatprep.subr.mxu0 0.0
        %350 = vmatpush1.msra.mxu0 0.0
        %351 = vmatprep.subr.mxu0 0.0
        %352 = vmatpush1.msra.mxu0 0.0
        %353 = vmatprep.subr.mxu0 0.0
        %354 = vmatpush1.msra.mxu0 0.0
        %355 = vmatprep.subr.mxu0 0.0
        %356 = vmatpush1.msra.mxu0 0.0
        %357 = vmatprep.subr.mxu0 0.0
        %358 = vmatpush1.msra.mxu0 0.0
        %359 = vmatprep.subr.mxu0 0.0
        %360 = vmatpush1.msra.mxu0 0.0
        %361 = vmatprep.subr.mxu0 0.0
        %362 = vmatpush1.msra.mxu0 0.0
        %363 = vmatprep.subr.mxu0 0.0
        %364 = vmatpush1.msra.mxu0 0.0
        %365 = vmatprep.subr.mxu0 0.0
        %366 = vmatpush1.msra.mxu0 0.0
        %367 = vmatprep.subr.mxu0 0.0
        %368 = vmatpush1.msra.mxu0 0.0
        %369 = vmatprep.subr.mxu0 0.0
        %370 = vmatpush1.msra.mxu0 0.0
        %371 = vmatprep.subr.mxu0 0.0
        %372 = vmatpush1.msra.mxu0 0.0
        %373 = vmatprep.subr.mxu0 0.0
        %374 = vmatpush1.msra.mxu0 0.0
        %375 = vmatprep.subr.mxu0 0.0
        %376 = vmatpush1.msra.mxu0 0.0
        %377 = vmatprep.subr.mxu0 0.0
        %378 = vmatpush1.msra.mxu0 0.0
        %379 = vmatprep.subr.mxu0 0.0
        %380 = vmatpush1.msra.mxu0 0.0
        %381 = vmatprep.mubr.f32.mxu0 0.0
        %382 = vmatmul.mubr.f32.gmra.mrb[0].mxu0 %v315
        %v383 = vpop.f32.mrb[0].mxu0
        %v384 = vadd.f32 0.0, %v383
        %v385 = vpop.f32.mrb[0].mxu0
        %386 = vdwg.mxu0
        %vm387 = vcmask 130048
        %v389 = vsel %vm387, %v306, 0
        %391 = vmatprep.subr.mxu0 0.0
        %392 = vmatpush1.msra.mxu0 %v307
        %393 = vmatprep.subr.mxu0 0.0
        %394 = vmatpush1.msra.mxu0 %v308
        %395 = vmatprep.subr.mxu0 0.0
        %396 = vmatpush1.msra.mxu0 0.0
        %397 = vmatprep.subr.mxu0 0.0
        %398 = vmatpush1.msra.mxu0 0.0
        %399 = vmatprep.subr.mxu0 0.0
        %400 = vmatpush1.msra.mxu0 0.0
        %401 = vmatprep.subr.mxu0 0.0
        %402 = vmatpush1.msra.mxu0 0.0
        %403 = vmatprep.subr.mxu0 0.0
        %404 = vmatpush1.msra.mxu0 0.0
        %405 = vmatprep.subr.mxu0 0.0
        %406 = vmatpush1.msra.mxu0 0.0
        %407 = vmatprep.subr.mxu0 0.0
        %408 = vmatpush1.msra.mxu0 0.0
        %409 = vmatprep.subr.mxu0 0.0
        %410 = vmatpush1.msra.mxu0 0.0
        %411 = vmatprep.subr.mxu0 0.0
        %412 = vmatpush1.msra.mxu0 0.0
        %413 = vmatprep.subr.mxu0 0.0
        %414 = vmatpush1.msra.mxu0 0.0
        %415 = vmatprep.subr.mxu0 0.0
        %416 = vmatpush1.msra.mxu0 0.0
        %417 = vmatprep.subr.mxu0 0.0
        %418 = vmatpush1.msra.mxu0 0.0
        %419 = vmatprep.subr.mxu0 0.0
        %420 = vmatpush1.msra.mxu0 0.0
        %421 = vmatprep.subr.mxu0 0.0
        %422 = vmatpush1.msra.mxu0 0.0
        %423 = vmatprep.subr.mxu0 0.0
        %424 = vmatpush1.msra.mxu0 0.0
        %425 = vmatprep.subr.mxu0 0.0
        %426 = vmatpush1.msra.mxu0 0.0
        %427 = vmatprep.subr.mxu0 0.0
        %428 = vmatpush1.msra.mxu0 0.0
        %429 = vmatprep.subr.mxu0 0.0
        %430 = vmatpush1.msra.mxu0 0.0
        %431 = vmatprep.subr.mxu0 0.0
        %432 = vmatpush1.msra.mxu0 0.0
        %433 = vmatprep.subr.mxu0 0.0
        %434 = vmatpush1.msra.mxu0 0.0
        %435 = vmatprep.subr.mxu0 0.0
        %436 = vmatpush1.msra.mxu0 0.0
        %437 = vmatprep.subr.mxu0 0.0
        %438 = vmatpush1.msra.mxu0 0.0
        %439 = vmatprep.subr.mxu0 0.0
        %440 = vmatpush1.msra.mxu0 0.0
        %441 = vmatprep.subr.mxu0 0.0
        %442 = vmatpush1.msra.mxu0 0.0
        %443 = vmatprep.subr.mxu0 0.0
        %444 = vmatpush1.msra.mxu0 0.0
        %445 = vmatprep.subr.mxu0 0.0
        %446 = vmatpush1.msra.mxu0 0.0
        %447 = vmatprep.subr.mxu0 0.0
        %448 = vmatpush1.msra.mxu0 0.0
        %449 = vmatprep.subr.mxu0 0.0
        %450 = vmatpush1.msra.mxu0 0.0
        %451 = vmatprep.subr.mxu0 0.0
        %452 = vmatpush1.msra.mxu0 0.0
        %453 = vmatprep.subr.mxu0 0.0
        %454 = vmatpush1.msra.mxu0 0.0
        %455 = vmatprep.mubr.f32.mxu0 0.0
        %456 = vmatmul.mubr.f32.gmra.mrb[0].mxu0 %v389
        %v457 = vpop.f32.mrb[0].mxu0
        %v458 = vadd.f32 %v384, %v457
        %v459 = vpop.f32.mrb[0].mxu0
        %460 = vdwg.mxu0
        %v461 = vld [vmem:[%s4] sm:$0x1]
        %v463 = vlaneseq
        %v464 = vshrl.u32 %v463, 7
        %v465 = vsub.s32 0, %v464
        %v466 = vrot.slane %v461, %v465
        %v468 = vadd.f32 %v458, %v466
        %469 = vst [vmem:[%s305] sm:$0xff] %v468
        %s470 = sand.u32 %s149, 1
        %s471 = scalar_lea.sflag [#allocation4], %s470
        %s472 = sand.u32 %s149, 1
        %s473 = smul.addr %s472, 8
        %s474 = scalar_lea.vmem [#allocation10], %s473
        // Predicated region
        $region57: #{tpu_custom_call.1} parent=39 // pred_check
          %p475 = pneg %p159
        $region58: #{tpu_custom_call.1} parent=39 // pred_check_branch
          %477 = sbr.rel (%p475) target = $region60
        $region59: #{tpu_custom_call.1} parent=39 // pred_region
          %s479 = ssub.s32 128, 128
          %480 = vsyncadd %s471, %s479
          %s481 = smul.addr %s26, 128
          %s482 = scalar_lea.hbm %s5, %s481
          %s484 = sshll.u32 %s474, 4
          %s485 = int_to_ptr.vmem [resolvable:$true] %s484
          %487 = dma.vmem_to_hbm [thread:$0]  %s485, 128, %s482, %s471
        $region60: #{tpu_custom_call.1} parent=39 // pred_fallthru
          _
      $region40: #{tpu_custom_call.1} parent=5 // pred_fallthru
        _
      %p488 = scmp.le.s32.totalorder 2, %s21
      // Predicated region
      $region61: #{tpu_custom_call.1} parent=5 // pred_check
        %p489 = pneg %p488
      $region62: #{tpu_custom_call.1} parent=5 // pred_check_branch
        %491 = sbr.rel (%p489) target = $region64
      $region63: #{tpu_custom_call.1} parent=5 // pred_region
        %s492 = ssub.s32 %s21, 2
        // Predicated region
        $region65: #{tpu_custom_call.1} parent=63 // pred_check
          %p493 = pneg %p165
        $region66: #{tpu_custom_call.1} parent=63 // pred_check_branch
          %495 = sbr.rel (%p493) target = $region68
        $region67: #{tpu_custom_call.1} parent=63 // pred_region
          %s496 = sand.u32 %s150, 1
          %s497 = scalar_lea.sflag [#allocation4], %s496
          %s498 = sand.u32 %s150, 1
          %s499 = smul.addr %s498, 8
          %s500 = scalar_lea.vmem [#allocation10], %s499
          %501 = dma.done %s497, 128
        $region68: #{tpu_custom_call.1} parent=63 // pred_fallthru
          _
      $region64: #{tpu_custom_call.1} parent=5 // pred_fallthru
        _
    $region6: #{tpu_custom_call.1} parent=1 // loop_footer
      %s25 = sadd.s32 1, %s21
    $region7: #{tpu_custom_call.1} parent=1 // loop_footer_branch
      %20 = sbr.rel target = $region3
    $region8: #{tpu_custom_call.1} parent=1 // loop_exit
      _
    %502 = vsyncpa [#allocation3], 1
    %s503 = scalar_lea.sflag [#allocation3], 1
    %504 = vsyncpa %s503, 1
    %505 = vsyncpa [#allocation6], 1
    %s506 = scalar_lea.sflag [#allocation6], 1
    %507 = vsyncpa %s506, 1
    %508 = vsyncpa [#allocation9], 1
    %509 = vsyncpa [#allocation4], 1
    %s510 = scalar_lea.sflag [#allocation4], 1
    %511 = vsyncpa %s510, 1

</llo_original>
